<compile_context>
chip_gen: v7x
topology: tpu7x:2x2x1
jax: 0.10.0
libtpu: 0.0.40
codegen_flags: <defaults>
</compile_context>

<pallas_src>
import jax
import jax.numpy as jnp
from jax import lax
from jax.experimental import pallas as pl
from jax.experimental.pallas import tpu as pltpu


# --------------------------------------------------------------------------
# adaLN modulation kernel: mod = SiLU(c) @ w_ada + b_ada, tiled over columns.
# One grid step produces a (B, tn) column tile of the (B, 2H) output.
# --------------------------------------------------------------------------
def _adaln_kernel(c_ref, wa_ref, ba_ref, mod_ref):
    c = c_ref[...].astype(jnp.float32)                         # (B, H)
    s = (c * jax.nn.sigmoid(c)).astype(wa_ref.dtype)           # SiLU, weight dtype
    acc = jnp.dot(s, wa_ref[...], preferred_element_type=jnp.float32)
    mod_ref[...] = (acc + ba_ref[...].astype(jnp.float32)).astype(mod_ref.dtype)


# --------------------------------------------------------------------------
# Main kernel: LayerNorm (no affine) -> modulate -> final Linear.
# One grid step handles a (tT, H) token tile of one batch element.
# --------------------------------------------------------------------------
def _final_layer_kernel(mod_ref, x_ref, wl_ref, bl_ref, o_ref):
    x = x_ref[...].astype(jnp.float32)                         # (tT, H)
    H = x.shape[-1]

    mod = mod_ref[...].astype(jnp.float32)                     # (1, 2H)
    shift = mod[:, :H]                                         # (1, H)
    one_plus_scale = 1.0 + mod[:, H:]                          # (1, H)

    # Two-pass LayerNorm statistics; the centered x is reused for normalize.
    mean = jnp.mean(x, axis=-1, keepdims=True)                 # (tT, 1)
    xc = x - mean                                              # (tT, H)
    var = jnp.mean(xc * xc, axis=-1, keepdims=True)            # (tT, 1)
    rinv = lax.rsqrt(var + 1e-6)                               # (tT, 1) -> EUP

    # Fused normalize + modulate (no (tT,H) g temporary).
    xm = (xc * rinv) * one_plus_scale + shift                  # (tT, H)

    # Final linear projection; bf16 MXU path if the weights are bf16,
    # f32 accumulation either way.
    out = jnp.dot(xm.astype(wl_ref.dtype), wl_ref[...],
                  preferred_element_type=jnp.float32)          # (tT, O)
    out = out + bl_ref[...].astype(jnp.float32)
    o_ref[...] = out.astype(o_ref.dtype)


# --------------------------------------------------------------------------
# Sizing helpers (generation / H / dtype aware).
# --------------------------------------------------------------------------
def _vmem_limit_bytes():
    cap = 64 << 20
    try:
        info = pltpu.get_tpu_info()
        cap = int(getattr(info, "vmem_capacity_bytes", cap))
    except Exception:
        pass
    # Half the physical VMEM, capped at 64 MiB: 32 MiB on v7x, 64 MiB on v5e/v6e.
    return int(min(cap // 2, 64 << 20))


def _pick_token_tile(T, H, O, x_bytes, w_bytes, out_bytes, budget_bytes):
    """Largest token tile whose per-grid-step VMEM footprint fits the budget."""
    # Grid-invariant operands (counted double-buffered) + the (1, 2H) mod tile.
    fixed = 2 * (H * O + O) * w_bytes + 2 * (2 * H) * 4
    for tT in (1024, 512, 256, 128, 64, 32, 16, 8):
        if tT > T:
            continue
        streamed = 2 * tT * H * x_bytes + 2 * tT * O * out_bytes
        temps = 3 * tT * H * 4        # x_f32 / centered x / modulated x (f32)
        if fixed + streamed + temps <= budget_bytes:
            return tT
    return T if T < 8 else 8


def _pick_ada_tile(n_cols, H, w_bytes, budget_bytes):
    divisors = [c for c in (512, 256, 128) if n_cols % c == 0]
    if not divisors:
        return n_cols                  # small 2H (e.g. test shapes): full width
    for cand in divisors:              # largest first
        if 2 * H * cand * w_bytes <= budget_bytes:
            return cand
    return divisors[-1]                # tight budget: smallest 128-divisor


# --------------------------------------------------------------------------
# Wrapper.
# --------------------------------------------------------------------------
def final_layer(x, c, w_ada, b_ada, w_lin, b_lin, *, token_tile=None):
    """x: (B, T, H), c: (B, H).
    w_ada: (H, 2H), b_ada: (1, 2H)  -- adaLN_modulation Linear, (in, out) layout
    w_lin: (H, O),  b_lin: (1, O)   -- final Linear, (in, out) layout
    Returns (B, T, O) in x.dtype.
    """
    B, T, H = x.shape
    O = w_lin.shape[1]
    H2 = w_ada.shape[1]
    assert H2 == 2 * H and b_ada.shape == (1, H2)
    assert w_lin.shape[0] == H and b_lin.shape == (1, O)

    vmem_limit = _vmem_limit_bytes()

    # ---- adaLN: mod = SiLU(c) @ w_ada + b_ada, tiled over the 2H columns ----
    tn = _pick_ada_tile(H2, H, w_ada.dtype.itemsize, vmem_limit // 2)
    mod = pl.pallas_call(
        _adaln_kernel,
        out_shape=jax.ShapeDtypeStruct((B, H2), jnp.float32),
        grid_spec=pltpu.PrefetchScalarGridSpec(
            num_scalar_prefetch=0,
            grid=(H2 // tn,),
            in_specs=[
                pl.BlockSpec((B, H), lambda n: (0, 0)),        # c (small, resident)
                pl.BlockSpec((H, tn), lambda n: (0, n)),       # w_ada column tile
                pl.BlockSpec((1, tn), lambda n: (0, n)),       # b_ada column tile
            ],
            out_specs=pl.BlockSpec((B, tn), lambda n: (0, n)),
        ),
        compiler_params=pltpu.CompilerParams(
            dimension_semantics=("parallel",),
            vmem_limit_bytes=vmem_limit),
    )(c, w_ada, b_ada)

    # ---- token tiling (VMEM-budgeted), tail-safe ----
    if token_tile is None:
        tT = _pick_token_tile(T, H, O, x.dtype.itemsize, w_lin.dtype.itemsize,
                              x.dtype.itemsize, int(0.6 * vmem_limit))
    else:
        tT = max(1, int(token_tile))
        tT = T if T < 8 else max(8, (tT // 8) * 8)   # keep sublane-aligned tiles
    nT = pl.cdiv(T, tT)
    T_pad = nT * tT
    x_in = x if T_pad == T else jnp.pad(x, ((0, 0), (0, T_pad - T), (0, 0)))

    out = pl.pallas_call(
        _final_layer_kernel,
        out_shape=jax.ShapeDtypeStruct((B, T_pad, O), x.dtype),
        grid_spec=pltpu.PrefetchScalarGridSpec(
            num_scalar_prefetch=0,
            grid=(B * nT,),            # flat axis -> balanced megacore split (v7x)
            in_specs=[
                pl.BlockSpec((1, H2), lambda i: (i // nT, 0)),                       # mod row
                pl.BlockSpec((pl.Squeezed(), tT, H), lambda i: (i // nT, i % nT, 0)),  # x tile
                pl.BlockSpec((H, O), lambda i: (0, 0)),                              # w_lin (const)
                pl.BlockSpec((1, O), lambda i: (0, 0)),                              # b_lin (const)
            ],
            out_specs=pl.BlockSpec((pl.Squeezed(), tT, O),
                                   lambda i: (i // nT, i % nT, 0)),
        ),
        compiler_params=pltpu.CompilerParams(
            dimension_semantics=("parallel",),
            vmem_limit_bytes=vmem_limit),
    )(mod, x_in, w_lin, b_lin)

    return out if T_pad == T else out[:, :T, :]


def final_layer_ref(x, c, w_ada, b_ada, w_lin, b_lin):
    """Pure-JAX reference mirroring the PyTorch module."""
    silu_c = c * jax.nn.sigmoid(c)
    ada = silu_c @ w_ada + b_ada[0]
    H = x.shape[-1]
    shift, scale = ada[:, :H], ada[:, H:]
    mean = jnp.mean(x, axis=-1, keepdims=True)
    var = jnp.mean((x - mean) ** 2, axis=-1, keepdims=True)
    xn = (x - mean) / jnp.sqrt(var + 1e-6)
    xm = xn * (1.0 + scale[:, None, :]) + shift[:, None, :]
    return xm @ w_lin + b_lin[0]


if __name__ == "__main__":
    # Small shapes consistent with the module.
    B, T = 2, 8                  # batch, sequence length (num patches)
    hidden_size = 32
    patch_size = 2
    out_channels = 4
    O = patch_size * patch_size * out_channels   # 16

    key = jax.random.PRNGKey(0)
    kx, kc, kwa, kba, kwl, kbl = jax.random.split(key, 6)

    x = jax.random.normal(kx, (B, T, hidden_size), dtype=jnp.float32)
    c = jax.random.normal(kc, (B, hidden_size), dtype=jnp.float32)

    # PyTorch Linear weight is (out, in); the kernel uses the transposed
    # (in, out) layout.
    w_ada = 0.05 * jax.random.normal(kwa, (hidden_size, 2 * hidden_size),
                                     dtype=jnp.float32)
    b_ada = 0.05 * jax.random.normal(kba, (1, 2 * hidden_size),
                                     dtype=jnp.float32)
    w_lin = 0.05 * jax.random.normal(kwl, (hidden_size, O), dtype=jnp.float32)
    b_lin = 0.05 * jax.random.normal(kbl, (1, O), dtype=jnp.float32)

    out = final_layer(x, c, w_ada, b_ada, w_lin, b_lin)
    out = jax.block_until_ready(out)

    ref = final_layer_ref(x, c, w_ada, b_ada, w_lin, b_lin)
    assert out.shape == (B, T, O), out.shape
    assert jnp.allclose(out, ref, atol=1e-4, rtol=1e-4), \
        float(jnp.max(jnp.abs(out - ref)))

    print("KERNEL_OK")
</pallas_src>

<mosaic_0001>
module attributes {stable_mosaic.version = 11 : i64} {
  func.func @_adaln_kernel(%arg0: i32, %arg1: memref<2x32xf32, #tpu.memory_space<vmem>>, %arg2: memref<32x64xf32, #tpu.memory_space<vmem>>, %arg3: memref<1x64xf32, #tpu.memory_space<vmem>>, %arg4: memref<2x64xf32, #tpu.memory_space<vmem>>) attributes {dimension_semantics = [#tpu.dimension_semantics<parallel>], iteration_bounds = array<i64: 1>, scalar_prefetch = 0 : i64, scratch_operands = 0 : i64, tpu.core_type = #tpu.core_type<tc>, window_params = [{pipeline_mode = #tpu.pipeline_mode<synchronous>, transform_indices = @transform_0, window_bounds = array<i64: 2, 32>}, {transform_indices = @transform_1, window_bounds = array<i64: 32, 64>}, {transform_indices = @transform_2, window_bounds = array<i64: 1, 64>}, {transform_indices = @transform_3, window_bounds = array<i64: 2, 64>}]} {
    %c0 = arith.constant 0 : index
    %c0_0 = arith.constant 0 : index
    %0 = vector.load %arg1[%c0, %c0_0] : memref<2x32xf32, #tpu.memory_space<vmem>>, vector<2x32xf32>
    %1 = arith.negf %0 : vector<2x32xf32>
    %2 = math.exp %1 : vector<2x32xf32>
    %cst = arith.constant 1.000000e+00 : f32
    %3 = vector.broadcast %cst : f32 to vector<2x32xf32>
    %4 = arith.addf %3, %2 : vector<2x32xf32>
    %5 = arith.divf %3, %4 : vector<2x32xf32>
    %6 = arith.mulf %0, %5 : vector<2x32xf32>
    %c0_1 = arith.constant 0 : index
    %c0_2 = arith.constant 0 : index
    %7 = vector.load %arg2[%c0_1, %c0_2] : memref<32x64xf32, #tpu.memory_space<vmem>>, vector<32x64xf32>
    %cst_3 = arith.constant dense<0.000000e+00> : vector<2x64xf32>
    %8 = tpu.matmul %6, %7, %cst_3 {dimension_numbers = #tpu.dot_dimension_numbers<[1], [0], [0], [1], [0, 0, 1, 1], [], []>} : vector<2x32xf32>, vector<32x64xf32>, vector<2x64xf32> -> vector<2x64xf32>
    %c0_4 = arith.constant 0 : index
    %c0_5 = arith.constant 0 : index
    %9 = vector.load %arg3[%c0_4, %c0_5] : memref<1x64xf32, #tpu.memory_space<vmem>>, vector<1x64xf32>
    %10 = vector.broadcast %9 : vector<1x64xf32> to vector<2x64xf32>
    %11 = arith.addf %8, %10 : vector<2x64xf32>
    %c0_6 = arith.constant 0 : index
    %c0_7 = arith.constant 0 : index
    %12 = vector.load %arg4[%c0_6, %c0_7] : memref<2x64xf32, #tpu.memory_space<vmem>>, vector<2x64xf32>
    tpu.vector_store %arg4[%c0_6, %c0_7], %11 {strides = array<i32>} : memref<2x64xf32, #tpu.memory_space<vmem>>, vector<2x64xf32>,
    return
  }
  func.func @transform_0(%arg0: i32) -> (i32, i32) {
    %c0_i32 = arith.constant 0 : i32
    %c0_i32_0 = arith.constant 0 : i32
    %c0_i32_1 = arith.constant 0 : i32
    return %c0_i32, %c0_i32_0 : i32, i32
  }
  func.func @transform_1(%arg0: i32) -> (i32, i32) {
    %c0_i32 = arith.constant 0 : i32
    %c0_i32_0 = arith.constant 0 : i32
    return %c0_i32, %arg0 : i32, i32
  }
  func.func @transform_2(%arg0: i32) -> (i32, i32) {
    %c0_i32 = arith.constant 0 : i32
    %c0_i32_0 = arith.constant 0 : i32
    return %c0_i32, %arg0 : i32, i32
  }
  func.func @transform_3(%arg0: i32) -> (i32, i32) {
    %c0_i32 = arith.constant 0 : i32
    %c0_i32_0 = arith.constant 0 : i32
    return %c0_i32, %arg0 : i32, i32
  }
}

</mosaic_0001>

<llo_original>
// kernel: tpu_custom_call.1
$region0: #{tpu_custom_call.1}
  #allocation0 [shape = 'u32[]', space=smem, size = 0x4, offset = 0x4, fixed_abs, tag = 'smem constant byte address 0x4 - core index']
  #allocation1 [shape = 'u32[144,128]{1,0:T(1,128)}', space=vmem, size = 0x12000, scoped, tag = 'internal scratch']
  %s0 = inlined_call_operand.hbm [shape: f32[2,32], index: 0, kind: input, shape index: {}]
  %s1 = inlined_call_operand.hbm [shape: f32[32,64], index: 1, kind: input, shape index: {}]
  %s2 = inlined_call_operand.vmem [shape: f32[1,64], index: 2, kind: input, shape index: {}]
  %s3 = inlined_call_operand.hbm [shape: f32[2,64], index: 3, kind: output, shape index: {}]
  %s4 = sld [smem:[#allocation0]]
  $region30: #{tpu_custom_call.1} parent=0
    _
  %s6 = ssub.s32 1, %s4
  %s7 = scalar_select 0, %s6, %s4
  $region1: #{tpu_custom_call.1} parent=0
    #allocation2 [shape = 'u8[1024]{0}', space=vmem, size = 0x400, scoped, tag = 'input window, operand 0, single buffered']
    #allocation3 [shape = 's32[1]{0}', space=sflag, size = 0x4, scoped, tag = 'scoped memory for tpu_custom_call.1']
    #allocation4 [shape = 's32[1]{0}', space=sflag, size = 0x4, scoped, tag = 'scoped memory for tpu_custom_call.1']
    #allocation5 [shape = 'u8[16384]{0}', space=vmem, size = 0x4000, scoped, tag = 'input window, operand 1, single buffered']
    #allocation6 [shape = 's32[1]{0}', space=sflag, size = 0x4, scoped, tag = 'scoped memory for tpu_custom_call.1']
    #allocation7 [shape = 'u8[1024]{0}', space=vmem, size = 0x400, scoped, tag = 'output window, operand 0, single buffered']
    %8 = vsyncpa [#allocation3], 0
    %9 = vsyncpa [#allocation6], 0
    %10 = vsyncpa [#allocation4], 0
    // Predicated region
    $region2: #{tpu_custom_call.1} parent=1 // pred_check
      _
    $region3: #{tpu_custom_call.1} parent=1 // pred_check_branch
      %12 = sbr.rel (0) target = $region5
    $region4: #{tpu_custom_call.1} parent=1 // pred_region
      %s14 = ssub.s32 32, 32
      %15 = vsyncadd [#allocation3], %s14
      %s17 = sshll.u32 [#allocation2], 4
      %s18 = int_to_ptr.vmem [resolvable:$true] %s17
      %20 = dma.hbm_to_vmem [thread:$0]  %s0, 32, %s18, [#allocation3]
    $region5: #{tpu_custom_call.1} parent=1 // pred_fallthru
      _
    // Predicated region
    $region6: #{tpu_custom_call.1} parent=1 // pred_check
      _
    $region7: #{tpu_custom_call.1} parent=1 // pred_check_branch
      %22 = sbr.rel (0) target = $region9
    $region8: #{tpu_custom_call.1} parent=1 // pred_region
      %s24 = ssub.s32 512, 512
      %25 = vsyncadd [#allocation6], %s24
      %s26 = sshll.u32 [#allocation5], 4
      %s27 = int_to_ptr.vmem [resolvable:$true] %s26
      %32 = dma.hbm_to_vmem [thread:$0]  %s1, 512, %s27, [#allocation6], 128, 128, 8
    $region9: #{tpu_custom_call.1} parent=1 // pred_fallthru
      _
    // Predicated region
    $region10: #{tpu_custom_call.1} parent=1 // pred_check
      _
    $region11: #{tpu_custom_call.1} parent=1 // pred_check_branch
      %34 = sbr.rel (0) target = $region13
    $region12: #{tpu_custom_call.1} parent=1 // pred_region
      _
    $region13: #{tpu_custom_call.1} parent=1 // pred_fallthru
      _
    // Predicated region
    $region14: #{tpu_custom_call.1} parent=1 // pred_check
      _
    $region15: #{tpu_custom_call.1} parent=1 // pred_check_branch
      %36 = sbr.rel (0) target = $region17
    $region16: #{tpu_custom_call.1} parent=1 // pred_region
      %37 = dma.done [#allocation3], 32
    $region17: #{tpu_custom_call.1} parent=1 // pred_fallthru
      _
    // Predicated region
    $region18: #{tpu_custom_call.1} parent=1 // pred_check
      _
    $region19: #{tpu_custom_call.1} parent=1 // pred_check_branch
      %39 = sbr.rel (0) target = $region21
    $region20: #{tpu_custom_call.1} parent=1 // pred_region
      %40 = dma.done [#allocation6], 512
    $region21: #{tpu_custom_call.1} parent=1 // pred_fallthru
      _
    %v41 = vld [vmem:[#allocation2] sm:$0x3]
    %v42 = vxor.u32 %v41, 2147483648
    %v43 = vmul.f32 %v42, 1.442695
    %v44 = vpow.pop %v43
    %v45 = vadd.f32 %v44, 1.0
    %v46 = vrcp.pop %v45
    %v47 = vmul.f32 1.0, %v46
    %v48 = vmul.f32 %v41, %v47
    %v49 = vld [vmem:[#allocation5] sm:$0xff]
    %v50 = vld [vmem:[#allocation5 + $0x8] sm:$0xff]
    %v51 = vld [vmem:[#allocation5 + $0x10] sm:$0xff]
    %v52 = vld [vmem:[#allocation5 + $0x18] sm:$0xff]
    %v53 = vld [vmem:[%s2] sm:$0x1]
    %v55 = vlaneseq
    %v56 = vshrl.u32 %v55, 7
    %v57 = vsub.s32 0, %v56
    %v58 = vrot.slane %v53, %v57
    %vm60 = vcmask 261120
    %v62 = vsel %vm60, %v48, 0
    %64 = vmatprep.subr.mxu0 0.0
    %65 = vmatpush1.msra.mxu0 %v49
    %66 = vmatprep.subr.mxu0 0.0
    %67 = vmatpush1.msra.mxu0 %v50
    %68 = vmatprep.subr.mxu0 0.0
    %69 = vmatpush1.msra.mxu0 %v51
    %70 = vmatprep.subr.mxu0 0.0
    %71 = vmatpush1.msra.mxu0 %v52
    %72 = vmatprep.subr.mxu0 0.0
    %73 = vmatpush1.msra.mxu0 0.0
    %74 = vmatprep.subr.mxu0 0.0
    %75 = vmatpush1.msra.mxu0 0.0
    %76 = vmatprep.subr.mxu0 0.0
    %77 = vmatpush1.msra.mxu0 0.0
    %78 = vmatprep.subr.mxu0 0.0
    %79 = vmatpush1.msra.mxu0 0.0
    %80 = vmatprep.subr.mxu0 0.0
    %81 = vmatpush1.msra.mxu0 0.0
    %82 = vmatprep.subr.mxu0 0.0
    %83 = vmatpush1.msra.mxu0 0.0
    %84 = vmatprep.subr.mxu0 0.0
    %85 = vmatpush1.msra.mxu0 0.0
    %86 = vmatprep.subr.mxu0 0.0
    %87 = vmatpush1.msra.mxu0 0.0
    %88 = vmatprep.subr.mxu0 0.0
    %89 = vmatpush1.msra.mxu0 0.0
    %90 = vmatprep.subr.mxu0 0.0
    %91 = vmatpush1.msra.mxu0 0.0
    %92 = vmatprep.subr.mxu0 0.0
    %93 = vmatpush1.msra.mxu0 0.0
    %94 = vmatprep.subr.mxu0 0.0
    %95 = vmatpush1.msra.mxu0 0.0
    %96 = vmatprep.subr.mxu0 0.0
    %97 = vmatpush1.msra.mxu0 0.0
    %98 = vmatprep.subr.mxu0 0.0
    %99 = vmatpush1.msra.mxu0 0.0
    %100 = vmatprep.subr.mxu0 0.0
    %101 = vmatpush1.msra.mxu0 0.0
    %102 = vmatprep.subr.mxu0 0.0
    %103 = vmatpush1.msra.mxu0 0.0
    %104 = vmatprep.subr.mxu0 0.0
    %105 = vmatpush1.msra.mxu0 0.0
    %106 = vmatprep.subr.mxu0 0.0
    %107 = vmatpush1.msra.mxu0 0.0
    %108 = vmatprep.subr.mxu0 0.0
    %109 = vmatpush1.msra.mxu0 0.0
    %110 = vmatprep.subr.mxu0 0.0
    %111 = vmatpush1.msra.mxu0 0.0
    %112 = vmatprep.subr.mxu0 0.0
    %113 = vmatpush1.msra.mxu0 0.0
    %114 = vmatprep.subr.mxu0 0.0
    %115 = vmatpush1.msra.mxu0 0.0
    %116 = vmatprep.subr.mxu0 0.0
    %117 = vmatpush1.msra.mxu0 0.0
    %118 = vmatprep.subr.mxu0 0.0
    %119 = vmatpush1.msra.mxu0 0.0
    %120 = vmatprep.subr.mxu0 0.0
    %121 = vmatpush1.msra.mxu0 0.0
    %122 = vmatprep.subr.mxu0 0.0
    %123 = vmatpush1.msra.mxu0 0.0
    %124 = vmatprep.subr.mxu0 0.0
    %125 = vmatpush1.msra.mxu0 0.0
    %126 = vmatprep.subr.mxu0 0.0
    %127 = vmatpush1.msra.mxu0 0.0
    %128 = vmatprep.mubr.f32.mxu0 0.0
    %129 = vmatmul.mubr.f32.gmra.mrb[0].mxu0 %v62
    %v130 = vpop.f32.mrb[0].mxu0
    %v131 = vadd.f32 %v58, %v130
    %v132 = vpop.f32.mrb[0].mxu0
    %133 = vdwg.mxu0
    %vm134 = vcmask 517120
    %135 = vst.msk [vmem:[#allocation7] sm:$0x3] %vm134, %v131
    // Predicated region
    $region22: #{tpu_custom_call.1} parent=1 // pred_check
      _
    $region23: #{tpu_custom_call.1} parent=1 // pred_check_branch
      %137 = sbr.rel (0) target = $region25
    $region24: #{tpu_custom_call.1} parent=1 // pred_region
      %s139 = ssub.s32 32, 32
      %140 = vsyncadd [#allocation4], %s139
      %s142 = sshll.u32 [#allocation7], 4
      %s143 = int_to_ptr.vmem [resolvable:$true] %s142
      %145 = dma.vmem_to_hbm [thread:$0]  %s143, 32, %s3, [#allocation4]
    $region25: #{tpu_custom_call.1} parent=1 // pred_fallthru
      _
    // Predicated region
    $region26: #{tpu_custom_call.1} parent=1 // pred_check
      _
    $region27: #{tpu_custom_call.1} parent=1 // pred_check_branch
      %147 = sbr.rel (0) target = $region29
    $region28: #{tpu_custom_call.1} parent=1 // pred_region
      %148 = dma.done [#allocation4], 32
    $region29: #{tpu_custom_call.1} parent=1 // pred_fallthru
      _
    %149 = vsyncpa [#allocation3], 1
    %150 = vsyncpa [#allocation6], 1
    %151 = vsyncpa [#allocation4], 1

</llo_original>
